<compile_context>
chip_gen: v6e
topology: v6e:2x2x1
jax: 0.10.0
libtpu: 0.0.40
codegen_flags: <defaults>
</compile_context>

<pallas_src>
import functools
import math

import jax
import jax.numpy as jnp
from jax.experimental import pallas as pl
from jax.experimental.pallas import tpu as pltpu

LANES = 128


def _round_up(n: int, m: int) -> int:
    return ((n + m - 1) // m) * m


def _tpu_tuning():
    """Per-generation block-size / grid-depth targets (safe fallback defaults)."""
    try:
        kind = jax.devices()[0].device_kind.lower()
    except Exception:  # pragma: no cover - defensive
        kind = ""
    if "v7" in kind or "7x" in kind:
        # 2 TensorCores, 3.2 TB/s HBM: bigger blocks, deeper parallel grid.
        # 4 MiB x 2 operands x 2 buffers = 16 MiB <= 32 MiB scoped default.
        return dict(block_bytes=4 << 20, grid_depth=8, overlap_min_bytes=1 << 20)
    if "v6" in kind:
        # Single TC: depth 2 is enough for DMA/compute overlap.
        return dict(block_bytes=4 << 20, grid_depth=2, overlap_min_bytes=2 << 20)
    # v5e / v5p / v4 / unknown: conservative (2 MiB x 2 x 2 = 8 MiB <= 16 MiB).
    return dict(block_bytes=2 << 20, grid_depth=2, overlap_min_bytes=2 << 20)


def _choose_blocks(B, S, C, pack, itemsize, tuning):
    """Pick (tb, ts, tc) block sizes for the canonical (B, S, C) view."""
    target = tuning["block_bytes"]
    depth = tuning["grid_depth"]
    overlap_min = tuning["overlap_min_bytes"]

    # Last (lane) dim: full extent unless one padded row-group already exceeds
    # the budget; tiles are multiples of 128 (ragged edge handled by pipeline).
    c_pad = _round_up(C, LANES)
    if pack * c_pad * itemsize <= target:
        tc, tc_pad = C, c_pad
    else:
        tc = max(LANES, (target // (pack * LANES * itemsize)) * LANES)
        tc_pad = tc

    # Second-to-last (sublane) dim: full extent when it fits, else multiples
    # of the dtype's sublane packing.
    s_pad = _round_up(S, pack)
    if s_pad * tc_pad * itemsize <= target:
        ts, ts_pad = S, s_pad
    else:
        ts = max(pack, (target // (tc_pad * pack * itemsize)) * pack)
        ts_pad = ts

    slab_bytes = ts_pad * tc_pad * itemsize          # VMEM footprint per leading index
    tb_cap = max(1, target // slab_bytes)

    d_s = pl.cdiv(S, ts)
    d_c = pl.cdiv(C, tc)
    total_bytes = B * S * C * itemsize
    if total_bytes < overlap_min:
        want_depth = 1                               # tiny input: one block
    else:
        # At least 2 steps for DMA/compute overlap, up to `depth` steps, but
        # never shrink blocks below ~512 KiB of useful data per step.
        want_depth = min(depth, max(2, total_bytes // (512 * 1024)))

    need_b = pl.cdiv(want_depth, d_s * d_c)
    tb = max(1, min(tb_cap, B, pl.cdiv(B, need_b)))
    return tb, ts, tc


def _rounding_kernel(x_ref, o_ref, *, precision, inv_precision, compute_dtype):
    x = x_ref[...].astype(compute_dtype)
    if inv_precision is not None:
        q = x * inv_precision        # exact when precision is a power of two
    else:
        q = x / precision            # true divide: bit-exact vs torch otherwise
    o_ref[...] = (jnp.round(q) * precision).astype(o_ref.dtype)


def rounding_layer(x: jnp.ndarray, precision: float) -> jnp.ndarray:
    """Pallas-backed equivalent of RoundingLayer(precision)(x) forward."""
    p = float(precision)
    orig_shape = x.shape
    dtype = x.dtype

    if x.size == 0:
        return x
    if not jnp.issubdtype(dtype, jnp.floating):
        # torch promotes int / float -> float; keep this rare path in plain XLA
        # (the kernel's cast back to the input dtype would truncate).
        return jnp.round(x / p) * p

    itemsize = jnp.dtype(dtype).itemsize
    pack = max(8, 32 // itemsize)                    # sublane packing per dtype
    compute_dtype = jnp.float32 if itemsize < 4 else dtype

    # Canonical 3D view: only leading dims are added/collapsed -> bitcast on
    # TPU (tiled layout depends only on the trailing two dims). No relayout,
    # no padding, no output slice.
    if x.ndim == 0:
        x3 = x.reshape(1, 1, 1)
    elif x.ndim == 1:
        x3 = x.reshape(1, 1, x.shape[0])
    elif x.ndim == 2:
        x3 = x.reshape(1, x.shape[0], x.shape[1])
    else:
        x3 = x.reshape(-1, x.shape[-2], x.shape[-1])
    B, S, C = x3.shape

    tuning = _tpu_tuning()
    tb, ts, tc = _choose_blocks(B, S, C, pack, itemsize, tuning)
    grid = (pl.cdiv(B, tb), pl.cdiv(S, ts), pl.cdiv(C, tc))

    # Power-of-two precision -> exact reciprocal multiply (hoisted, bit-exact).
    is_pow2 = p > 0.0 and math.frexp(p)[0] == 0.5
    inv_p = (1.0 / p) if is_pow2 else None

    n = x.size
    out3 = pl.pallas_call(
        functools.partial(
            _rounding_kernel,
            precision=p,
            inv_precision=inv_p,
            compute_dtype=compute_dtype,
        ),
        out_shape=jax.ShapeDtypeStruct((B, S, C), dtype),
        grid_spec=pltpu.PrefetchScalarGridSpec(
            num_scalar_prefetch=0,
            grid=grid,
            in_specs=[pl.BlockSpec((tb, ts, tc), lambda b, s, c: (b, s, c))],
            out_specs=pl.BlockSpec((tb, ts, tc), lambda b, s, c: (b, s, c)),
        ),
        compiler_params=pltpu.CompilerParams(
            dimension_semantics=("parallel", "parallel", "parallel"),
        ),
        cost_estimate=pl.CostEstimate(
            flops=3 * n, transcendentals=0, bytes_accessed=2 * n * itemsize
        ),
    )(x3)

    return out3.reshape(orig_shape)


def rounding_layer_ref(x: jnp.ndarray, precision: float) -> jnp.ndarray:
    """Pure-JAX reference mirroring the kernel's documented semantics."""
    dt = x.dtype
    if jnp.issubdtype(dt, jnp.floating) and jnp.dtype(dt).itemsize < 4:
        xc = x.astype(jnp.float32)
        return (jnp.round(xc / precision) * precision).astype(dt)
    return jnp.round(x / precision) * precision


if __name__ == "__main__":
    precision = 0.25

    # 1) Conv-style NCHW activations (the shapes this layer sees in the model).
    x = jax.random.normal(jax.random.PRNGKey(0), (2, 4, 16, 16), jnp.float32) * 3.0
    out = jax.block_until_ready(rounding_layer(x, precision))
    assert out.shape == x.shape and out.dtype == x.dtype
    assert jnp.array_equal(out, rounding_layer_ref(x, precision)), "NCHW mismatch"

    # 2) Ragged trailing dims (not multiples of 8/128): handled with
    #    full-extent trailing blocks — no padding or slicing anywhere.
    y = jax.random.normal(jax.random.PRNGKey(1), (2, 3, 33, 17), jnp.float32) * 3.0
    out_y = jax.block_until_ready(rounding_layer(y, precision))
    assert out_y.shape == y.shape and out_y.dtype == y.dtype
    assert jnp.array_equal(out_y, rounding_layer_ref(y, precision)), "ragged mismatch"

    # 3) Non-power-of-two precision exercises the true-divide path. Inputs are
    #    built so quotients sit far from rounding boundaries, making the exact
    #    comparison robust to divide-lowering differences.
    p2 = 0.3
    q = jnp.arange(2 * 3 * 33 * 17, dtype=jnp.float32).reshape(2, 3, 33, 17) - 500.0
    z = (q + 0.2) * p2
    out_z = jax.block_until_ready(rounding_layer(z, p2))
    assert jnp.array_equal(out_z, rounding_layer_ref(z, p2)), "non-pow2 mismatch"

    # 4) bf16 input (computed in f32, cast back; reference mirrors that).
    w = (jax.random.normal(jax.random.PRNGKey(2), (2, 4, 16, 16), jnp.float32) * 3.0
         ).astype(jnp.bfloat16)
    out_w = jax.block_until_ready(rounding_layer(w, precision))
    assert out_w.dtype == w.dtype
    assert jnp.array_equal(out_w, rounding_layer_ref(w, precision)), "bf16 mismatch"

    # 5) Larger input exercises leading-dim tiling / a multi-step parallel grid.
    v = jax.random.normal(jax.random.PRNGKey(3), (32, 8, 32, 128), jnp.float32) * 3.0
    out_v = jax.block_until_ready(rounding_layer(v, precision))
    assert jnp.array_equal(out_v, rounding_layer_ref(v, precision)), "large mismatch"

    print("KERNEL_OK")
</pallas_src>

<mosaic_0001>
module attributes {stable_mosaic.version = 11 : i64} {
  func.func @_rounding_kernel(%arg0: i32, %arg1: i32, %arg2: i32, %arg3: memref<8x16x16xf32, #tpu.memory_space<vmem>>, %arg4: memref<8x16x16xf32, #tpu.memory_space<vmem>>) attributes {dimension_semantics = [#tpu.dimension_semantics<parallel>, #tpu.dimension_semantics<parallel>, #tpu.dimension_semantics<parallel>], iteration_bounds = array<i64: 1, 1, 1>, scalar_prefetch = 0 : i64, scratch_operands = 0 : i64, tpu.core_type = #tpu.core_type<tc>, window_params = [{transform_indices = @transform_0, window_bounds = array<i64: 8, 16, 16>}, {transform_indices = @transform_1, window_bounds = array<i64: 8, 16, 16>}]} {
    %c0 = arith.constant 0 : index
    %c0_0 = arith.constant 0 : index
    %c0_1 = arith.constant 0 : index
    %0 = vector.load %arg3[%c0, %c0_0, %c0_1] : memref<8x16x16xf32, #tpu.memory_space<vmem>>, vector<8x16x16xf32>
    %cst = arith.constant 4.000000e+00 : f32
    %1 = vector.broadcast %cst : f32 to vector<8x16x16xf32>
    %2 = arith.mulf %0, %1 : vector<8x16x16xf32>
    %3 = math.roundeven %2 : vector<8x16x16xf32>
    %cst_2 = arith.constant 2.500000e-01 : f32
    %4 = vector.broadcast %cst_2 : f32 to vector<8x16x16xf32>
    %5 = arith.mulf %3, %4 : vector<8x16x16xf32>
    %c0_3 = arith.constant 0 : index
    %c0_4 = arith.constant 0 : index
    %c0_5 = arith.constant 0 : index
    %6 = vector.load %arg4[%c0_3, %c0_4, %c0_5] : memref<8x16x16xf32, #tpu.memory_space<vmem>>, vector<8x16x16xf32>
    tpu.vector_store %arg4[%c0_3, %c0_4, %c0_5], %5 {strides = array<i32>} : memref<8x16x16xf32, #tpu.memory_space<vmem>>, vector<8x16x16xf32>,
    return
  }
  func.func @transform_0(%arg0: i32, %arg1: i32, %arg2: i32) -> (i32, i32, i32) {
    %c0_i32 = arith.constant 0 : i32
    return %arg0, %arg1, %arg2 : i32, i32, i32
  }
  func.func @transform_1(%arg0: i32, %arg1: i32, %arg2: i32) -> (i32, i32, i32) {
    %c0_i32 = arith.constant 0 : i32
    return %arg0, %arg1, %arg2 : i32, i32, i32
  }
}

</mosaic_0001>

<llo_original>
// kernel: tpu_custom_call.1
$region0: #{tpu_custom_call.1}
  #allocation0 [shape = 'u32[]', space=smem, size = 0x4, offset = 0x4, fixed_abs, tag = 'smem constant byte address 0x4 - core index']
  #allocation1 [shape = 'u32[144,128]{1,0:T(1,128)}', space=vmem, size = 0x12000, scoped, tag = 'internal scratch']
  %s0 = inlined_call_operand.hbm [shape: f32[8,16,16], index: 0, kind: input, shape index: {}]
  %s1 = inlined_call_operand.hbm [shape: f32[8,16,16], index: 1, kind: output, shape index: {}]
  %s2 = sld [smem:[#allocation0]]
  $region18: #{tpu_custom_call.1} parent=0
    _
  %s4 = ssub.s32 1, %s2
  %s5 = scalar_select 0, %s4, %s2
  $region1: #{tpu_custom_call.1} parent=0
    #allocation2 [shape = 'u8[65536]{0}', space=vmem, size = 0x10000, scoped, tag = 'input window, operand 0, single buffered']
    #allocation3 [shape = 's32[1]{0}', space=sflag, size = 0x4, scoped, tag = 'scoped memory for tpu_custom_call.1']
    #allocation4 [shape = 's32[1]{0}', space=sflag, size = 0x4, scoped, tag = 'scoped memory for tpu_custom_call.1']
    #allocation5 [shape = 'u8[65536]{0}', space=vmem, size = 0x10000, scoped, tag = 'output window, operand 0, single buffered']
    %6 = vsyncpa [#allocation3], 0
    %7 = vsyncpa [#allocation4], 0
    // Predicated region
    $region2: #{tpu_custom_call.1} parent=1 // pred_check
      _
    $region3: #{tpu_custom_call.1} parent=1 // pred_check_branch
      %9 = sbr.rel (0) target = $region5
    $region4: #{tpu_custom_call.1} parent=1 // pred_region
      %s11 = ssub.s32 2048, 2048
      %12 = vsyncadd [#allocation3], %s11
      %s13 = sshll.u32 [#allocation2], 4
      %s14 = int_to_ptr.vmem [resolvable:$true] %s13
      %19 = dma.hbm_to_vmem [thread:$0]  %s0, 2048, %s14, [#allocation3], 128, 128, 8
    $region5: #{tpu_custom_call.1} parent=1 // pred_fallthru
      _
    // Predicated region
    $region6: #{tpu_custom_call.1} parent=1 // pred_check
      _
    $region7: #{tpu_custom_call.1} parent=1 // pred_check_branch
      %21 = sbr.rel (0) target = $region9
    $region8: #{tpu_custom_call.1} parent=1 // pred_region
      %22 = dma.done [#allocation3], 2048
    $region9: #{tpu_custom_call.1} parent=1 // pred_fallthru
      _
    %v23 = vld [vmem:[#allocation2] sm:$0xff]
    %v24 = vld [vmem:[#allocation2 + $0x8] sm:$0xff]
    %v25 = vld [vmem:[#allocation2 + $0x10] sm:$0xff]
    %v26 = vld [vmem:[#allocation2 + $0x18] sm:$0xff]
    %v27 = vld [vmem:[#allocation2 + $0x20] sm:$0xff]
    %v28 = vld [vmem:[#allocation2 + $0x28] sm:$0xff]
    %v29 = vld [vmem:[#allocation2 + $0x30] sm:$0xff]
    %v30 = vld [vmem:[#allocation2 + $0x38] sm:$0xff]
    %v31 = vld [vmem:[#allocation2 + $0x40] sm:$0xff]
    %v32 = vld [vmem:[#allocation2 + $0x48] sm:$0xff]
    %v33 = vld [vmem:[#allocation2 + $0x50] sm:$0xff]
    %v34 = vld [vmem:[#allocation2 + $0x58] sm:$0xff]
    %v35 = vld [vmem:[#allocation2 + $0x60] sm:$0xff]
    %v36 = vld [vmem:[#allocation2 + $0x68] sm:$0xff]
    %v37 = vld [vmem:[#allocation2 + $0x70] sm:$0xff]
    %v38 = vld [vmem:[#allocation2 + $0x78] sm:$0xff]
    %v39 = vmul.f32 %v23, 4.0
    %v40 = vmul.f32 %v24, 4.0
    %v41 = vmul.f32 %v25, 4.0
    %v42 = vmul.f32 %v26, 4.0
    %v43 = vmul.f32 %v27, 4.0
    %v44 = vmul.f32 %v28, 4.0
    %v45 = vmul.f32 %v29, 4.0
    %v46 = vmul.f32 %v30, 4.0
    %v47 = vmul.f32 %v31, 4.0
    %v48 = vmul.f32 %v32, 4.0
    %v49 = vmul.f32 %v33, 4.0
    %v50 = vmul.f32 %v34, 4.0
    %v51 = vmul.f32 %v35, 4.0
    %v52 = vmul.f32 %v36, 4.0
    %v53 = vmul.f32 %v37, 4.0
    %v54 = vmul.f32 %v38, 4.0
    %v55 = vround.ne.pseudo %v39
    %v56 = vround.ne.pseudo %v40
    %v57 = vround.ne.pseudo %v41
    %v58 = vround.ne.pseudo %v42
    %v59 = vround.ne.pseudo %v43
    %v60 = vround.ne.pseudo %v44
    %v61 = vround.ne.pseudo %v45
    %v62 = vround.ne.pseudo %v46
    %v63 = vround.ne.pseudo %v47
    %v64 = vround.ne.pseudo %v48
    %v65 = vround.ne.pseudo %v49
    %v66 = vround.ne.pseudo %v50
    %v67 = vround.ne.pseudo %v51
    %v68 = vround.ne.pseudo %v52
    %v69 = vround.ne.pseudo %v53
    %v70 = vround.ne.pseudo %v54
    %v71 = vmul.f32 %v55, 0.25
    %v72 = vmul.f32 %v56, 0.25
    %v73 = vmul.f32 %v57, 0.25
    %v74 = vmul.f32 %v58, 0.25
    %v75 = vmul.f32 %v59, 0.25
    %v76 = vmul.f32 %v60, 0.25
    %v77 = vmul.f32 %v61, 0.25
    %v78 = vmul.f32 %v62, 0.25
    %v79 = vmul.f32 %v63, 0.25
    %v80 = vmul.f32 %v64, 0.25
    %v81 = vmul.f32 %v65, 0.25
    %v82 = vmul.f32 %v66, 0.25
    %v83 = vmul.f32 %v67, 0.25
    %v84 = vmul.f32 %v68, 0.25
    %v85 = vmul.f32 %v69, 0.25
    %v86 = vmul.f32 %v70, 0.25
    %vm87 = vcmask 130048
    %88 = vst.msk [vmem:[#allocation5] sm:$0xff] %vm87, %v71
    %89 = vst.msk [vmem:[#allocation5 + $0x8] sm:$0xff] %vm87, %v72
    %90 = vst.msk [vmem:[#allocation5 + $0x10] sm:$0xff] %vm87, %v73
    %91 = vst.msk [vmem:[#allocation5 + $0x18] sm:$0xff] %vm87, %v74
    %92 = vst.msk [vmem:[#allocation5 + $0x20] sm:$0xff] %vm87, %v75
    %93 = vst.msk [vmem:[#allocation5 + $0x28] sm:$0xff] %vm87, %v76
    %94 = vst.msk [vmem:[#allocation5 + $0x30] sm:$0xff] %vm87, %v77
    %95 = vst.msk [vmem:[#allocation5 + $0x38] sm:$0xff] %vm87, %v78
    %96 = vst.msk [vmem:[#allocation5 + $0x40] sm:$0xff] %vm87, %v79
    %97 = vst.msk [vmem:[#allocation5 + $0x48] sm:$0xff] %vm87, %v80
    %98 = vst.msk [vmem:[#allocation5 + $0x50] sm:$0xff] %vm87, %v81
    %99 = vst.msk [vmem:[#allocation5 + $0x58] sm:$0xff] %vm87, %v82
    %100 = vst.msk [vmem:[#allocation5 + $0x60] sm:$0xff] %vm87, %v83
    %101 = vst.msk [vmem:[#allocation5 + $0x68] sm:$0xff] %vm87, %v84
    %102 = vst.msk [vmem:[#allocation5 + $0x70] sm:$0xff] %vm87, %v85
    %103 = vst.msk [vmem:[#allocation5 + $0x78] sm:$0xff] %vm87, %v86
    // Predicated region
    $region10: #{tpu_custom_call.1} parent=1 // pred_check
      _
    $region11: #{tpu_custom_call.1} parent=1 // pred_check_branch
      %105 = sbr.rel (0) target = $region13
    $region12: #{tpu_custom_call.1} parent=1 // pred_region
      %s107 = ssub.s32 2048, 2048
      %108 = vsyncadd [#allocation4], %s107
      %s109 = sshll.u32 [#allocation5], 4
      %s110 = int_to_ptr.vmem [resolvable:$true] %s109
      %115 = dma.vmem_to_hbm [thread:$0]  %s110, 2048, %s1, [#allocation4], 128, 128, 8
    $region13: #{tpu_custom_call.1} parent=1 // pred_fallthru
      _
    // Predicated region
    $region14: #{tpu_custom_call.1} parent=1 // pred_check
      _
    $region15: #{tpu_custom_call.1} parent=1 // pred_check_branch
      %117 = sbr.rel (0) target = $region17
    $region16: #{tpu_custom_call.1} parent=1 // pred_region
      %118 = dma.done [#allocation4], 2048
    $region17: #{tpu_custom_call.1} parent=1 // pred_fallthru
      _
    %119 = vsyncpa [#allocation3], 1
    %120 = vsyncpa [#allocation4], 1

</llo_original>
